<compile_context>
chip_gen: v7x
topology: tpu7x:2x2x1
jax: 0.10.0
libtpu: 0.0.40
codegen_flags: <defaults>
</compile_context>

<pallas_src>
import jax
import jax.numpy as jnp
from jax.experimental import pallas as pl
from jax.experimental.pallas import tpu as pltpu


def _round_up(x, m):
    return ((x + m - 1) // m) * m


def _device_defaults():
    """Generation-aware (row_tile, vmem_limit_bytes).

    v6e / v7x MXUs are 2x256x256 -> 256-row tiles; v5e MXU is 128-wide -> 128.
    v5e/v6e have 128 MiB VMEM (limit 96 MiB); v7x has 64 MiB/TC and unknown
    chips get the conservative 48 MiB.
    """
    tile_n = 256
    vmem_limit = 48 * 1024 * 1024
    try:
        kind = jax.devices()[0].device_kind.lower()
    except Exception:
        kind = ""
    if "v5" in kind:
        tile_n = 128
    if ("v5" in kind) or ("v6" in kind):
        vmem_limit = 96 * 1024 * 1024
    return tile_n, vmem_limit


# ----------------------------------------------------------------------------
# Pallas kernel: fused 2-layer MLP feature extractor + (fused) predictor head
# ----------------------------------------------------------------------------
def _box_head_kernel(x_ref, w6_ref, b6_ref, w7_ref, b7_ref, wpred_ref, bpred_ref,
                     feat_ref, pred_ref):
    # x arrives f32 straight from pooling; the bf16 cast rides the VPU (the
    # kernel is MXU-bound, so it is free filler).  f32 accumulation on MXU.
    x = x_ref[...].astype(jnp.bfloat16)                               # (TILE_N, Din_pad)
    # fc6 + ReLU
    h6 = jnp.dot(x, w6_ref[...], preferred_element_type=jnp.float32) + b6_ref[...]
    h6 = jnp.maximum(h6, 0.0)
    # fc7 + ReLU
    h7 = jnp.dot(h6.astype(jnp.bfloat16), w7_ref[...],
                 preferred_element_type=jnp.float32) + b7_ref[...]
    h7 = jnp.maximum(h7, 0.0)
    feat_ref[...] = h7                                                # x returned by head
    # fused predictor: [cls_score | bbox_pred | zero-pad] -> one lane-dense store
    pred_ref[...] = (jnp.dot(h7.astype(jnp.bfloat16), wpred_ref[...],
                             preferred_element_type=jnp.float32) + bpred_ref[...])


# ----------------------------------------------------------------------------
# One-time parameter prepacking ("model load time", not per forward)
# ----------------------------------------------------------------------------
def prepack_box_head_params(params):
    """Pad to lane-dense widths, fuse cls+box predictor, cast weights to bf16."""
    d_in, rep = params["w6"].shape
    num_classes = params["wcls"].shape[1]
    pred_w = num_classes + 4 * num_classes

    d_in_pad = _round_up(d_in, 128)
    rep_pad = _round_up(rep, 128)
    pred_w_pad = _round_up(pred_w, 128)

    w6 = jnp.zeros((d_in_pad, rep_pad), jnp.float32).at[:d_in, :rep].set(params["w6"])
    b6 = jnp.zeros((1, rep_pad), jnp.float32).at[:, :rep].set(params["b6"])
    w7 = jnp.zeros((rep_pad, rep_pad), jnp.float32).at[:rep, :rep].set(params["w7"])
    b7 = jnp.zeros((1, rep_pad), jnp.float32).at[:, :rep].set(params["b7"])
    wpred = jnp.zeros((rep_pad, pred_w_pad), jnp.float32)
    wpred = wpred.at[:rep, :num_classes].set(params["wcls"])
    wpred = wpred.at[:rep, num_classes:pred_w].set(params["wbox"])
    bpred = jnp.zeros((1, pred_w_pad), jnp.float32)
    bpred = bpred.at[:, :num_classes].set(params["bcls"])
    bpred = bpred.at[:, num_classes:pred_w].set(params["bboxp"])

    # TODO(synk): optional fp8 (v7x) / int8 (v5e/v6e) quantization of w6 would
    # halve the resident VMEM footprint; kept bf16 here for drop-in numerics.
    return {
        "w6": w6.astype(jnp.bfloat16), "b6": b6,
        "w7": w7.astype(jnp.bfloat16), "b7": b7,
        "wpred": wpred.astype(jnp.bfloat16), "bpred": bpred,
        "d_in": d_in, "rep": rep, "num_classes": num_classes, "pred_w": pred_w,
        "d_in_pad": d_in_pad, "rep_pad": rep_pad, "pred_w_pad": pred_w_pad,
    }


def box_head_mlp_predictor(x_flat, packed, *, tile_n=None):
    """x_flat: (N_rois, C*P*P) float32 -> (feats, class_logits, box_regression)."""
    n, d_in = x_flat.shape
    assert d_in == packed["d_in"], (d_in, packed["d_in"])
    rep = packed["rep"]
    num_classes = packed["num_classes"]
    pred_w = packed["pred_w"]
    d_in_pad, rep_pad, pred_w_pad = (packed["d_in_pad"], packed["rep_pad"],
                                     packed["pred_w_pad"])

    # Zero proposals (empty concatenate in the PyTorch path).
    if n == 0:
        return (jnp.zeros((0, rep), jnp.float32),
                jnp.zeros((0, num_classes), jnp.float32),
                jnp.zeros((0, 4 * num_classes), jnp.float32))

    default_tile, vmem_limit = _device_defaults()
    if tile_n is None:
        tile_n = default_tile
    # Floor at 16 rows (full bf16 sublane packing for the casted x / h tiles).
    tile_n = max(16, min(tile_n, _round_up(n, 16)))

    # Bucketed ROI padding: power-of-two number of tiles -> a handful of
    # compiled variants regardless of per-batch RPN proposal counts.
    n_pad = tile_n * pl.next_power_of_2(pl.cdiv(n, tile_n))

    x_p = x_flat
    if (n_pad != n) or (d_in_pad != d_in):
        x_p = jnp.pad(x_flat, ((0, n_pad - n), (0, d_in_pad - d_in)))
    grid = (n_pad // tile_n,)

    flops = 2 * n_pad * (d_in_pad * rep_pad + rep_pad * rep_pad + rep_pad * pred_w_pad)
    bytes_accessed = (n_pad * d_in_pad * 4                       # x (f32, read)
                      + (d_in_pad * rep_pad + rep_pad * rep_pad
                         + rep_pad * pred_w_pad) * 2             # bf16 weights (once)
                      + (2 * rep_pad + pred_w_pad) * 4           # f32 biases
                      + n_pad * rep_pad * 4 + n_pad * pred_w_pad * 4)  # outputs

    def _call(single_buffer_weights):
        row_spec = lambda cols: pl.BlockSpec((tile_n, cols), lambda i: (i, 0))
        if single_buffer_weights:
            # Constant index_map -> one resident copy is enough; Buffered(1)
            # stops the pipeline from allocating a useless second buffer
            # (critical for the ~26 MB bf16 fc6 weight at production shapes).
            const_spec = lambda r, c: pl.BlockSpec((r, c), lambda i: (0, 0),
                                                   pipeline_mode=pl.Buffered(1))
        else:
            const_spec = lambda r, c: pl.BlockSpec((r, c), lambda i: (0, 0))
        return pl.pallas_call(
            _box_head_kernel,
            out_shape=(
                jax.ShapeDtypeStruct((n_pad, rep_pad), jnp.float32),      # feats
                jax.ShapeDtypeStruct((n_pad, pred_w_pad), jnp.float32),   # cls+box fused
            ),
            grid_spec=pltpu.PrefetchScalarGridSpec(
                num_scalar_prefetch=0,
                grid=grid,
                in_specs=[
                    row_spec(d_in_pad),                  # x tile (pipelined over ROIs)
                    const_spec(d_in_pad, rep_pad),       # w6 (resident, single-buffered)
                    const_spec(1, rep_pad),              # b6
                    const_spec(rep_pad, rep_pad),        # w7
                    const_spec(1, rep_pad),              # b7
                    const_spec(rep_pad, pred_w_pad),     # fused predictor weight
                    const_spec(1, pred_w_pad),           # fused predictor bias
                ],
                out_specs=(row_spec(rep_pad), row_spec(pred_w_pad)),
            ),
            compiler_params=pltpu.CompilerParams(
                dimension_semantics=("parallel",),
                vmem_limit_bytes=vmem_limit,
            ),
            cost_estimate=pl.CostEstimate(
                flops=int(flops), transcendentals=0,
                bytes_accessed=int(bytes_accessed)),
        )(x_p, packed["w6"], packed["b6"], packed["w7"], packed["b7"],
          packed["wpred"], packed["bpred"])

    try:
        feats, pred = _call(single_buffer_weights=True)
    except Exception:
        # Fallback if this toolchain rejects single-deep pipelining on the
        # resident weight operands; numerics are identical either way.
        feats, pred = _call(single_buffer_weights=False)

    feats = feats[:n, :rep]
    class_logits = pred[:n, :num_classes]
    box_regression = pred[:n, num_classes:pred_w]
    return feats, class_logits, box_regression


# ----------------------------------------------------------------------------
# ROIAlign pooler (JAX glue — data-dependent bilinear gather)
# ----------------------------------------------------------------------------
# TODO(synk): a full Pallas version would use PrefetchScalarGridSpec with the
# box table as scalar prefetch and manual make_async_copy of only the needed
# feature rows; this data-dependent gather stage is the next Pallas target.
def _roi_align_one(feat_chw, box, pooled_size, sampling_ratio, spatial_scale):
    C, H, W = feat_chw.shape
    P, S = pooled_size, sampling_ratio
    x1, y1, x2, y2 = [box[i] * spatial_scale for i in range(4)]
    roi_w = jnp.maximum(x2 - x1, 1.0)
    roi_h = jnp.maximum(y2 - y1, 1.0)
    bin_w = roi_w / P
    bin_h = roi_h / P

    ks = jnp.arange(P * S, dtype=jnp.float32) + 0.5
    # TODO(synk): clamps to [0, H-1]/[0, W-1]; the CUDA kernel zeroes samples
    # whose unclamped coords fall below -1 (differs slightly for border boxes).
    ys = jnp.clip(y1 + ks * bin_h / S, 0.0, H - 1.0)
    xs = jnp.clip(x1 + ks * bin_w / S, 0.0, W - 1.0)

    y0f = jnp.floor(ys)
    x0f = jnp.floor(xs)
    ly = ys - y0f
    lx = xs - x0f
    hy = 1.0 - ly
    hx = 1.0 - lx
    y0 = y0f.astype(jnp.int32)
    x0 = x0f.astype(jnp.int32)
    y1i = jnp.minimum(y0 + 1, H - 1)
    x1i = jnp.minimum(x0 + 1, W - 1)

    f_y0 = feat_chw[:, y0, :]      # (C, P*S, W)
    f_y1 = feat_chw[:, y1i, :]     # (C, P*S, W)
    v = (hy[None, :, None] * hx[None, None, :] * f_y0[:, :, x0]
         + hy[None, :, None] * lx[None, None, :] * f_y0[:, :, x1i]
         + ly[None, :, None] * hx[None, None, :] * f_y1[:, :, x0]
         + ly[None, :, None] * lx[None, None, :] * f_y1[:, :, x1i])   # (C, P*S, P*S)

    pooled = v.reshape(C, P, S, P, S).mean(axis=(2, 4))               # (C, P, P)
    return pooled


def roi_align_per_image(feat_chw, boxes_img, pooled_size, sampling_ratio,
                        spatial_scale):
    """feat_chw: (C, H, W); boxes_img: (n_i, 4) xyxy -> (n_i, C, P, P)."""
    return jax.vmap(
        lambda b: _roi_align_one(feat_chw, b, pooled_size, sampling_ratio,
                                 spatial_scale)
    )(boxes_img)


def roi_align_batched(features, boxes, pooled_size, sampling_ratio, spatial_scale):
    """features: (B, C, H, W); boxes: (B, n, 4) -> (B, n, C, P, P) in one call."""
    return jax.vmap(
        lambda f, bs: roi_align_per_image(f, bs, pooled_size, sampling_ratio,
                                          spatial_scale)
    )(features, boxes)


# ----------------------------------------------------------------------------
# ROIBoxHead forward (inference path)
# ----------------------------------------------------------------------------
def roi_box_head_forward(features, proposals, packed_params, *, pooled_size=4,
                         sampling_ratio=2, spatial_scale=1.0):
    """
    features     : (B, C, H, W) float32   (single FPN level)
    proposals    : list of (n_i, 4) xyxy boxes per image
    packed_params: output of prepack_box_head_params (done once at load time)
    Returns (x, (class_logits, box_regression), {}) matching the eval path of
    the PyTorch module (result BoxLists replaced by raw head outputs).
    """
    counts = [int(p.shape[0]) for p in proposals]
    if len(set(counts)) == 1:
        # Single batched ROIAlign call (no per-image Python loop / concat).
        boxes = jnp.stack(list(proposals), axis=0)                    # (B, n, 4)
        pooled = roi_align_batched(features, boxes, pooled_size,
                                   sampling_ratio, spatial_scale)     # (B, n, C, P, P)
        pooled = pooled.reshape((-1,) + pooled.shape[2:])             # (N, C, P, P)
    else:
        # Ragged proposal counts: per-image gather, each feature map read once.
        pooled = jnp.concatenate([
            roi_align_per_image(features[i], proposals[i], pooled_size,
                                sampling_ratio, spatial_scale)
            for i in range(len(proposals))
        ], axis=0)                                                    # (N, C, P, P)

    x_flat = pooled.reshape(pooled.shape[0], -1)                      # (N, C*P*P) f32

    x, class_logits, box_regression = box_head_mlp_predictor(x_flat, packed_params)

    # TODO(synk): post_processor (box decode + per-class NMS) and
    # loss_evaluator (proposal matching / subsampling, cls + smooth-L1 losses)
    # have no clean Pallas equivalent and are omitted.
    return x, (class_logits, box_regression), {}


# ----------------------------------------------------------------------------
# Deterministic parameter construction (shapes implied by the module __init__)
# ----------------------------------------------------------------------------
def make_params(key, in_channels, pooled_size, representation_size, num_classes):
    d_in = in_channels * pooled_size * pooled_size
    ks = jax.random.split(key, 4)
    s = 0.01
    return {
        "w6":    jax.random.normal(ks[0], (d_in, representation_size), jnp.float32) * s,
        "b6":    jnp.zeros((1, representation_size), jnp.float32),
        "w7":    jax.random.normal(ks[1], (representation_size, representation_size), jnp.float32) * s,
        "b7":    jnp.zeros((1, representation_size), jnp.float32),
        "wcls":  jax.random.normal(ks[2], (representation_size, num_classes), jnp.float32) * s,
        "bcls":  jnp.zeros((1, num_classes), jnp.float32),
        "wbox":  jax.random.normal(ks[3], (representation_size, 4 * num_classes), jnp.float32) * 0.001,
        "bboxp": jnp.zeros((1, 4 * num_classes), jnp.float32),
    }


if __name__ == "__main__":
    key = jax.random.PRNGKey(0)
    k_feat, k_box, k_param = jax.random.split(key, 3)

    # Small, module-consistent shapes.
    B, C, H, W = 2, 4, 16, 16           # features (NCHW, one FPN level)
    n_props = 8                         # proposals per image
    pooled_size = 4
    representation_size = 32
    num_classes = 5

    features = jax.random.normal(k_feat, (B, C, H, W), jnp.float32)

    # Deterministic proposal boxes (xyxy), guaranteed x2>x1, y2>y1, in-image.
    raw = jax.random.uniform(k_box, (B, n_props, 4), jnp.float32,
                             minval=0.0, maxval=float(W - 2))
    x1 = jnp.minimum(raw[..., 0], raw[..., 2])
    y1 = jnp.minimum(raw[..., 1], raw[..., 3])
    x2 = jnp.maximum(raw[..., 0], raw[..., 2]) + 1.0
    y2 = jnp.maximum(raw[..., 1], raw[..., 3]) + 1.0
    boxes = jnp.stack([x1, y1, x2, y2], axis=-1)                     # (B, n_props, 4)
    proposals = [boxes[i] for i in range(B)]

    params = make_params(k_param, C, pooled_size, representation_size, num_classes)
    packed_params = prepack_box_head_params(params)   # once, at "model load"

    x, (class_logits, box_regression), losses = roi_box_head_forward(
        features, proposals, packed_params,
        pooled_size=pooled_size, sampling_ratio=2, spatial_scale=1.0)

    jax.block_until_ready((x, class_logits, box_regression))

    assert x.shape == (B * n_props, representation_size)
    assert class_logits.shape == (B * n_props, num_classes)
    assert box_regression.shape == (B * n_props, 4 * num_classes)
    assert losses == {}
    assert bool(jnp.all(jnp.isfinite(x)))
    assert bool(jnp.all(jnp.isfinite(class_logits)))
    assert bool(jnp.all(jnp.isfinite(box_regression)))

    print("KERNEL_OK")
</pallas_src>

<mosaic_0001>
module attributes {stable_mosaic.version = 11 : i64} {
  func.func @_box_head_kernel(%arg0: i32, %arg1: memref<16x128xf32, #tpu.memory_space<vmem>>, %arg2: memref<128x128xbf16, #tpu.memory_space<vmem>>, %arg3: memref<1x128xf32, #tpu.memory_space<vmem>>, %arg4: memref<128x128xbf16, #tpu.memory_space<vmem>>, %arg5: memref<1x128xf32, #tpu.memory_space<vmem>>, %arg6: memref<128x128xbf16, #tpu.memory_space<vmem>>, %arg7: memref<1x128xf32, #tpu.memory_space<vmem>>, %arg8: memref<16x128xf32, #tpu.memory_space<vmem>>, %arg9: memref<16x128xf32, #tpu.memory_space<vmem>>) attributes {dimension_semantics = [#tpu.dimension_semantics<parallel>], iteration_bounds = array<i64: 1>, scalar_prefetch = 0 : i64, scratch_operands = 0 : i64, tpu.core_type = #tpu.core_type<tc>, window_params = [{transform_indices = @transform_0, window_bounds = array<i64: 16, 128>}, {pipeline_mode = #tpu.pipeline_mode<synchronous>, transform_indices = @transform_1, window_bounds = array<i64: 128, 128>}, {pipeline_mode = #tpu.pipeline_mode<synchronous>, transform_indices = @transform_2, window_bounds = array<i64: 1, 128>}, {pipeline_mode = #tpu.pipeline_mode<synchronous>, transform_indices = @transform_3, window_bounds = array<i64: 128, 128>}, {pipeline_mode = #tpu.pipeline_mode<synchronous>, transform_indices = @transform_4, window_bounds = array<i64: 1, 128>}, {pipeline_mode = #tpu.pipeline_mode<synchronous>, transform_indices = @transform_5, window_bounds = array<i64: 128, 128>}, {pipeline_mode = #tpu.pipeline_mode<synchronous>, transform_indices = @transform_6, window_bounds = array<i64: 1, 128>}, {transform_indices = @transform_7, window_bounds = array<i64: 16, 128>}, {transform_indices = @transform_8, window_bounds = array<i64: 16, 128>}]} {
    %c0 = arith.constant 0 : index
    %c0_0 = arith.constant 0 : index
    %0 = vector.load %arg1[%c0, %c0_0] : memref<16x128xf32, #tpu.memory_space<vmem>>, vector<16x128xf32>
    %1 = arith.truncf %0 : vector<16x128xf32> to vector<16x128xbf16>
    %c0_1 = arith.constant 0 : index
    %c0_2 = arith.constant 0 : index
    %2 = vector.load %arg2[%c0_1, %c0_2] : memref<128x128xbf16, #tpu.memory_space<vmem>>, vector<128x128xbf16>
    %cst = arith.constant dense<0.000000e+00> : vector<16x128xf32>
    %3 = tpu.matmul %1, %2, %cst {dimension_numbers = #tpu.dot_dimension_numbers<[1], [0], [0], [1], [0, 0, 1, 1], [], []>} : vector<16x128xbf16>, vector<128x128xbf16>, vector<16x128xf32> -> vector<16x128xf32>
    %c0_3 = arith.constant 0 : index
    %c0_4 = arith.constant 0 : index
    %4 = vector.load %arg3[%c0_3, %c0_4] : memref<1x128xf32, #tpu.memory_space<vmem>>, vector<1x128xf32>
    %5 = vector.broadcast %4 : vector<1x128xf32> to vector<16x128xf32>
    %6 = arith.addf %3, %5 : vector<16x128xf32>
    %cst_5 = arith.constant 0.000000e+00 : f32
    %7 = vector.broadcast %cst_5 : f32 to vector<16x128xf32>
    %8 = arith.maximumf %6, %7 : vector<16x128xf32>
    %9 = arith.truncf %8 : vector<16x128xf32> to vector<16x128xbf16>
    %c0_6 = arith.constant 0 : index
    %c0_7 = arith.constant 0 : index
    %10 = vector.load %arg4[%c0_6, %c0_7] : memref<128x128xbf16, #tpu.memory_space<vmem>>, vector<128x128xbf16>
    %cst_8 = arith.constant dense<0.000000e+00> : vector<16x128xf32>
    %11 = tpu.matmul %9, %10, %cst_8 {dimension_numbers = #tpu.dot_dimension_numbers<[1], [0], [0], [1], [0, 0, 1, 1], [], []>} : vector<16x128xbf16>, vector<128x128xbf16>, vector<16x128xf32> -> vector<16x128xf32>
    %c0_9 = arith.constant 0 : index
    %c0_10 = arith.constant 0 : index
    %12 = vector.load %arg5[%c0_9, %c0_10] : memref<1x128xf32, #tpu.memory_space<vmem>>, vector<1x128xf32>
    %13 = vector.broadcast %12 : vector<1x128xf32> to vector<16x128xf32>
    %14 = arith.addf %11, %13 : vector<16x128xf32>
    %cst_11 = arith.constant 0.000000e+00 : f32
    %15 = vector.broadcast %cst_11 : f32 to vector<16x128xf32>
    %16 = arith.maximumf %14, %15 : vector<16x128xf32>
    %c0_12 = arith.constant 0 : index
    %c0_13 = arith.constant 0 : index
    %17 = vector.load %arg8[%c0_12, %c0_13] : memref<16x128xf32, #tpu.memory_space<vmem>>, vector<16x128xf32>
    tpu.vector_store %arg8[%c0_12, %c0_13], %16 {strides = array<i32>} : memref<16x128xf32, #tpu.memory_space<vmem>>, vector<16x128xf32>,
    %18 = arith.truncf %16 : vector<16x128xf32> to vector<16x128xbf16>
    %c0_14 = arith.constant 0 : index
    %c0_15 = arith.constant 0 : index
    %19 = vector.load %arg6[%c0_14, %c0_15] : memref<128x128xbf16, #tpu.memory_space<vmem>>, vector<128x128xbf16>
    %cst_16 = arith.constant dense<0.000000e+00> : vector<16x128xf32>
    %20 = tpu.matmul %18, %19, %cst_16 {dimension_numbers = #tpu.dot_dimension_numbers<[1], [0], [0], [1], [0, 0, 1, 1], [], []>} : vector<16x128xbf16>, vector<128x128xbf16>, vector<16x128xf32> -> vector<16x128xf32>
    %c0_17 = arith.constant 0 : index
    %c0_18 = arith.constant 0 : index
    %21 = vector.load %arg7[%c0_17, %c0_18] : memref<1x128xf32, #tpu.memory_space<vmem>>, vector<1x128xf32>
    %22 = vector.broadcast %21 : vector<1x128xf32> to vector<16x128xf32>
    %23 = arith.addf %20, %22 : vector<16x128xf32>
    %c0_19 = arith.constant 0 : index
    %c0_20 = arith.constant 0 : index
    %24 = vector.load %arg9[%c0_19, %c0_20] : memref<16x128xf32, #tpu.memory_space<vmem>>, vector<16x128xf32>
    tpu.vector_store %arg9[%c0_19, %c0_20], %23 {strides = array<i32>} : memref<16x128xf32, #tpu.memory_space<vmem>>, vector<16x128xf32>,
    return
  }
  func.func @transform_0(%arg0: i32) -> (i32, i32) {
    %c0_i32 = arith.constant 0 : i32
    %c0_i32_0 = arith.constant 0 : i32
    return %arg0, %c0_i32 : i32, i32
  }
  func.func @transform_1(%arg0: i32) -> (i32, i32) {
    %c0_i32 = arith.constant 0 : i32
    %c0_i32_0 = arith.constant 0 : i32
    %c0_i32_1 = arith.constant 0 : i32
    return %c0_i32, %c0_i32_0 : i32, i32
  }
  func.func @transform_2(%arg0: i32) -> (i32, i32) {
    %c0_i32 = arith.constant 0 : i32
    %c0_i32_0 = arith.constant 0 : i32
    %c0_i32_1 = arith.constant 0 : i32
    return %c0_i32, %c0_i32_0 : i32, i32
  }
  func.func @transform_3(%arg0: i32) -> (i32, i32) {
    %c0_i32 = arith.constant 0 : i32
    %c0_i32_0 = arith.constant 0 : i32
    %c0_i32_1 = arith.constant 0 : i32
    return %c0_i32, %c0_i32_0 : i32, i32
  }
  func.func @transform_4(%arg0: i32) -> (i32, i32) {
    %c0_i32 = arith.constant 0 : i32
    %c0_i32_0 = arith.constant 0 : i32
    %c0_i32_1 = arith.constant 0 : i32
    return %c0_i32, %c0_i32_0 : i32, i32
  }
  func.func @transform_5(%arg0: i32) -> (i32, i32) {
    %c0_i32 = arith.constant 0 : i32
    %c0_i32_0 = arith.constant 0 : i32
    %c0_i32_1 = arith.constant 0 : i32
    return %c0_i32, %c0_i32_0 : i32, i32
  }
  func.func @transform_6(%arg0: i32) -> (i32, i32) {
    %c0_i32 = arith.constant 0 : i32
    %c0_i32_0 = arith.constant 0 : i32
    %c0_i32_1 = arith.constant 0 : i32
    return %c0_i32, %c0_i32_0 : i32, i32
  }
  func.func @transform_7(%arg0: i32) -> (i32, i32) {
    %c0_i32 = arith.constant 0 : i32
    %c0_i32_0 = arith.constant 0 : i32
    return %arg0, %c0_i32 : i32, i32
  }
  func.func @transform_8(%arg0: i32) -> (i32, i32) {
    %c0_i32 = arith.constant 0 : i32
    %c0_i32_0 = arith.constant 0 : i32
    return %arg0, %c0_i32 : i32, i32
  }
}

module attributes {stable_mosaic.version = 11 : i64} {
  func.func @_box_head_kernel(%arg0: i32, %arg1: memref<16x128xf32, #tpu.memory_space<vmem>>, %arg2: memref<128x128xbf16, #tpu.memory_space<vmem>>, %arg3: memref<1x128xf32, #tpu.memory_space<vmem>>, %arg4: memref<128x128xbf16, #tpu.memory_space<vmem>>, %arg5: memref<1x128xf32, #tpu.memory_space<vmem>>, %arg6: memref<128x128xbf16, #tpu.memory_space<vmem>>, %arg7: memref<1x128xf32, #tpu.memory_space<vmem>>, %arg8: memref<16x128xf32, #tpu.memory_space<vmem>>, %arg9: memref<16x128xf32, #tpu.memory_space<vmem>>) attributes {dimension_semantics = [#tpu.dimension_semantics<parallel>], iteration_bounds = array<i64: 1>, scalar_prefetch = 0 : i64, scratch_operands = 0 : i64, tpu.core_type = #tpu.core_type<tc>, window_params = [{transform_indices = @transform_0, window_bounds = array<i64: 16, 128>}, {pipeline_mode = #tpu.pipeline_mode<synchronous>, transform_indices = @transform_1, window_bounds = array<i64: 128, 128>}, {pipeline_mode = #tpu.pipeline_mode<synchronous>, transform_indices = @transform_2, window_bounds = array<i64: 1, 128>}, {pipeline_mode = #tpu.pipeline_mode<synchronous>, transform_indices = @transform_3, window_bounds = array<i64: 128, 128>}, {pipeline_mode = #tpu.pipeline_mode<synchronous>, transform_indices = @transform_4, window_bounds = array<i64: 1, 128>}, {pipeline_mode = #tpu.pipeline_mode<synchronous>, transform_indices = @transform_5, window_bounds = array<i64: 128, 128>}, {pipeline_mode = #tpu.pipeline_mode<synchronous>, transform_indices = @transform_6, window_bounds = array<i64: 1, 128>}, {transform_indices = @transform_7, window_bounds = array<i64: 16, 128>}, {transform_indices = @transform_8, window_bounds = array<i64: 16, 128>}]} {
    %c0 = arith.constant 0 : index
    %c0_0 = arith.constant 0 : index
    %0 = vector.load %arg1[%c0, %c0_0] : memref<16x128xf32, #tpu.memory_space<vmem>>, vector<16x128xf32>
    %1 = arith.truncf %0 : vector<16x128xf32> to vector<16x128xbf16>
    %c0_1 = arith.constant 0 : index
    %c0_2 = arith.constant 0 : index
    %2 = vector.load %arg2[%c0_1, %c0_2] : memref<128x128xbf16, #tpu.memory_space<vmem>>, vector<128x128xbf16>
    %cst = arith.constant dense<0.000000e+00> : vector<16x128xf32>
    %3 = tpu.matmul %1, %2, %cst {dimension_numbers = #tpu.dot_dimension_numbers<[1], [0], [0], [1], [0, 0, 1, 1], [], []>} : vector<16x128xbf16>, vector<128x128xbf16>, vector<16x128xf32> -> vector<16x128xf32>
    %c0_3 = arith.constant 0 : index
    %c0_4 = arith.constant 0 : index
    %4 = vector.load %arg3[%c0_3, %c0_4] : memref<1x128xf32, #tpu.memory_space<vmem>>, vector<1x128xf32>
    %5 = vector.broadcast %4 : vector<1x128xf32> to vector<16x128xf32>
    %6 = arith.addf %3, %5 : vector<16x128xf32>
    %cst_5 = arith.constant 0.000000e+00 : f32
    %7 = vector.broadcast %cst_5 : f32 to vector<16x128xf32>
    %8 = arith.maximumf %6, %7 : vector<16x128xf32>
    %9 = arith.truncf %8 : vector<16x128xf32> to vector<16x128xbf16>
    %c0_6 = arith.constant 0 : index
    %c0_7 = arith.constant 0 : index
    %10 = vector.load %arg4[%c0_6, %c0_7] : memref<128x128xbf16, #tpu.memory_space<vmem>>, vector<128x128xbf16>
    %cst_8 = arith.constant dense<0.000000e+00> : vector<16x128xf32>
    %11 = tpu.matmul %9, %10, %cst_8 {dimension_numbers = #tpu.dot_dimension_numbers<[1], [0], [0], [1], [0, 0, 1, 1], [], []>} : vector<16x128xbf16>, vector<128x128xbf16>, vector<16x128xf32> -> vector<16x128xf32>
    %c0_9 = arith.constant 0 : index
    %c0_10 = arith.constant 0 : index
    %12 = vector.load %arg5[%c0_9, %c0_10] : memref<1x128xf32, #tpu.memory_space<vmem>>, vector<1x128xf32>
    %13 = vector.broadcast %12 : vector<1x128xf32> to vector<16x128xf32>
    %14 = arith.addf %11, %13 : vector<16x128xf32>
    %cst_11 = arith.constant 0.000000e+00 : f32
    %15 = vector.broadcast %cst_11 : f32 to vector<16x128xf32>
    %16 = arith.maximumf %14, %15 : vector<16x128xf32>
    %c0_12 = arith.constant 0 : index
    %c0_13 = arith.constant 0 : index
    %17 = vector.load %arg8[%c0_12, %c0_13] : memref<16x128xf32, #tpu.memory_space<vmem>>, vector<16x128xf32>
    tpu.vector_store %arg8[%c0_12, %c0_13], %16 {strides = array<i32>} : memref<16x128xf32, #tpu.memory_space<vmem>>, vector<16x128xf32>,
    %18 = arith.truncf %16 : vector<16x128xf32> to vector<16x128xbf16>
    %c0_14 = arith.constant 0 : index
    %c0_15 = arith.constant 0 : index
    %19 = vector.load %arg6[%c0_14, %c0_15] : memref<128x128xbf16, #tpu.memory_space<vmem>>, vector<128x128xbf16>
    %cst_16 = arith.constant dense<0.000000e+00> : vector<16x128xf32>
    %20 = tpu.matmul %18, %19, %cst_16 {dimension_numbers = #tpu.dot_dimension_numbers<[1], [0], [0], [1], [0, 0, 1, 1], [], []>} : vector<16x128xbf16>, vector<128x128xbf16>, vector<16x128xf32> -> vector<16x128xf32>
    %c0_17 = arith.constant 0 : index
    %c0_18 = arith.constant 0 : index
    %21 = vector.load %arg7[%c0_17, %c0_18] : memref<1x128xf32, #tpu.memory_space<vmem>>, vector<1x128xf32>
    %22 = vector.broadcast %21 : vector<1x128xf32> to vector<16x128xf32>
    %23 = arith.addf %20, %22 : vector<16x128xf32>
    %c0_19 = arith.constant 0 : index
    %c0_20 = arith.constant 0 : index
    %24 = vector.load %arg9[%c0_19, %c0_20] : memref<16x128xf32, #tpu.memory_space<vmem>>, vector<16x128xf32>
    tpu.vector_store %arg9[%c0_19, %c0_20], %23 {strides = array<i32>} : memref<16x128xf32, #tpu.memory_space<vmem>>, vector<16x128xf32>,
    return
  }
  func.func @transform_0(%arg0: i32) -> (i32, i32) {
    %c0_i32 = arith.constant 0 : i32
    %c0_i32_0 = arith.constant 0 : i32
    return %arg0, %c0_i32 : i32, i32
  }
  func.func @transform_1(%arg0: i32) -> (i32, i32) {
    %c0_i32 = arith.constant 0 : i32
    %c0_i32_0 = arith.constant 0 : i32
    %c0_i32_1 = arith.constant 0 : i32
    return %c0_i32, %c0_i32_0 : i32, i32
  }
  func.func @transform_2(%arg0: i32) -> (i32, i32) {
    %c0_i32 = arith.constant 0 : i32
    %c0_i32_0 = arith.constant 0 : i32
    %c0_i32_1 = arith.constant 0 : i32
    return %c0_i32, %c0_i32_0 : i32, i32
  }
  func.func @transform_3(%arg0: i32) -> (i32, i32) {
    %c0_i32 = arith.constant 0 : i32
    %c0_i32_0 = arith.constant 0 : i32
    %c0_i32_1 = arith.constant 0 : i32
    return %c0_i32, %c0_i32_0 : i32, i32
  }
  func.func @transform_4(%arg0: i32) -> (i32, i32) {
    %c0_i32 = arith.constant 0 : i32
    %c0_i32_0 = arith.constant 0 : i32
    %c0_i32_1 = arith.constant 0 : i32
    return %c0_i32, %c0_i32_0 : i32, i32
  }
  func.func @transform_5(%arg0: i32) -> (i32, i32) {
    %c0_i32 = arith.constant 0 : i32
    %c0_i32_0 = arith.constant 0 : i32
    %c0_i32_1 = arith.constant 0 : i32
    return %c0_i32, %c0_i32_0 : i32, i32
  }
  func.func @transform_6(%arg0: i32) -> (i32, i32) {
    %c0_i32 = arith.constant 0 : i32
    %c0_i32_0 = arith.constant 0 : i32
    %c0_i32_1 = arith.constant 0 : i32
    return %c0_i32, %c0_i32_0 : i32, i32
  }
  func.func @transform_7(%arg0: i32) -> (i32, i32) {
    %c0_i32 = arith.constant 0 : i32
    %c0_i32_0 = arith.constant 0 : i32
    return %arg0, %c0_i32 : i32, i32
  }
  func.func @transform_8(%arg0: i32) -> (i32, i32) {
    %c0_i32 = arith.constant 0 : i32
    %c0_i32_0 = arith.constant 0 : i32
    return %arg0, %c0_i32 : i32, i32
  }
}

</mosaic_0001>

<llo_original>
// kernel: tpu_custom_call.1
$region0: #{tpu_custom_call.1}
  #allocation0 [shape = 'u32[]', space=smem, size = 0x4, offset = 0x4, fixed_abs, tag = 'smem constant byte address 0x4 - core index']
  #allocation1 [shape = 'u32[144,128]{1,0:T(1,128)}', space=vmem, size = 0x12000, scoped, tag = 'internal scratch']
  %s0 = inlined_call_operand.hbm [shape: f32[16,128], index: 0, kind: input, shape index: {}]
  %s1 = inlined_call_operand.hbm [shape: bf16[128,128], index: 1, kind: input, shape index: {}]
  %s2 = inlined_call_operand.vmem [shape: f32[1,128], index: 2, kind: input, shape index: {}]
  %s3 = inlined_call_operand.hbm [shape: bf16[128,128], index: 3, kind: input, shape index: {}]
  %s4 = inlined_call_operand.vmem [shape: f32[1,128], index: 4, kind: input, shape index: {}]
  %s5 = inlined_call_operand.hbm [shape: bf16[128,128], index: 5, kind: input, shape index: {}]
  %s6 = inlined_call_operand.vmem [shape: f32[1,128], index: 6, kind: input, shape index: {}]
  %s7 = inlined_call_operand.hbm [shape: f32[16,128], index: 7, kind: output, shape index: {0}]
  %s8 = inlined_call_operand.hbm [shape: f32[16,128], index: 8, kind: output, shape index: {1}]
  %9 = xla_tuple %s7, %s8
  %s10 = sld [smem:[#allocation0]]
  $region62: #{tpu_custom_call.1} parent=0
    _
  %s12 = ssub.s32 1, %s10
  %s13 = scalar_select 0, %s12, %s10
  $region1: #{tpu_custom_call.1} parent=0
    #allocation2 [shape = 'u8[8192]{0}', space=vmem, size = 0x2000, scoped, tag = 'input window, operand 0, single buffered']
    #allocation3 [shape = 's32[1]{0}', space=sflag, size = 0x4, scoped, tag = 'scoped memory for tpu_custom_call.1']
    #allocation4 [shape = 's32[1]{0}', space=sflag, size = 0x4, scoped, tag = 'scoped memory for tpu_custom_call.1']
    #allocation5 [shape = 'u8[32768]{0}', space=vmem, size = 0x8000, scoped, tag = 'input window, operand 1, single buffered']
    #allocation6 [shape = 's32[1]{0}', space=sflag, size = 0x4, scoped, tag = 'scoped memory for tpu_custom_call.1']
    #allocation7 [shape = 'u8[32768]{0}', space=vmem, size = 0x8000, scoped, tag = 'input window, operand 3, single buffered']
    #allocation8 [shape = 'u8[32768]{0}', space=vmem, size = 0x8000, scoped, tag = 'input window, operand 5, single buffered']
    #allocation9 [shape = 's32[1]{0}', space=sflag, size = 0x4, scoped, tag = 'scoped memory for tpu_custom_call.1']
    #allocation10 [shape = 'u8[8192]{0}', space=vmem, size = 0x2000, scoped, tag = 'output window, operand 0, single buffered']
    #allocation11 [shape = 'u8[8192]{0}', space=vmem, size = 0x2000, scoped, tag = 'output window, operand 1, single buffered']
    #allocation12 [shape = 's32[1]{0}', space=sflag, size = 0x4, scoped, tag = 'scoped memory for tpu_custom_call.1']
    %14 = vsyncpa [#allocation3], 0
    %15 = vsyncpa [#allocation6], 0
    %16 = vsyncpa [#allocation9], 0
    %17 = vsyncpa [#allocation4], 0
    %18 = vsyncpa [#allocation12], 0
    // Predicated region
    $region2: #{tpu_custom_call.1} parent=1 // pred_check
      _
    $region3: #{tpu_custom_call.1} parent=1 // pred_check_branch
      %20 = sbr.rel (0) target = $region5
    $region4: #{tpu_custom_call.1} parent=1 // pred_region
      %s22 = ssub.s32 256, 256
      %23 = vsyncadd [#allocation3], %s22
      %s24 = sshll.u32 [#allocation2], 4
      %s25 = int_to_ptr.vmem [resolvable:$true] %s24
      %30 = dma.hbm_to_vmem [thread:$0]  %s0, 256, %s25, [#allocation3], 128, 128, 8
    $region5: #{tpu_custom_call.1} parent=1 // pred_fallthru
      _
    // Predicated region
    $region6: #{tpu_custom_call.1} parent=1 // pred_check
      _
    $region7: #{tpu_custom_call.1} parent=1 // pred_check_branch
      %32 = sbr.rel (0) target = $region9
    $region8: #{tpu_custom_call.1} parent=1 // pred_region
      %s34 = ssub.s32 1024, 1024
      %35 = vsyncadd [#allocation6], %s34
      %s36 = sshll.u32 [#allocation5], 4
      %s37 = int_to_ptr.vmem [resolvable:$true] %s36
      %42 = dma.hbm_to_vmem [thread:$0]  %s1, 1024, %s37, [#allocation6], 64, 64, 4
    $region9: #{tpu_custom_call.1} parent=1 // pred_fallthru
      _
    // Predicated region
    $region10: #{tpu_custom_call.1} parent=1 // pred_check
      _
    $region11: #{tpu_custom_call.1} parent=1 // pred_check_branch
      %44 = sbr.rel (0) target = $region13
    $region12: #{tpu_custom_call.1} parent=1 // pred_region
      _
    $region13: #{tpu_custom_call.1} parent=1 // pred_fallthru
      _
    // Predicated region
    $region14: #{tpu_custom_call.1} parent=1 // pred_check
      _
    $region15: #{tpu_custom_call.1} parent=1 // pred_check_branch
      %46 = sbr.rel (0) target = $region17
    $region16: #{tpu_custom_call.1} parent=1 // pred_region
      %s48 = ssub.s32 1024, 1024
      %49 = vsyncadd [#allocation6], %s48
      %s50 = sshll.u32 [#allocation7], 4
      %s51 = int_to_ptr.vmem [resolvable:$true] %s50
      %56 = dma.hbm_to_vmem [thread:$0]  %s3, 1024, %s51, [#allocation6], 64, 64, 4
    $region17: #{tpu_custom_call.1} parent=1 // pred_fallthru
      _
    // Predicated region
    $region18: #{tpu_custom_call.1} parent=1 // pred_check
      _
    $region19: #{tpu_custom_call.1} parent=1 // pred_check_branch
      %58 = sbr.rel (0) target = $region21
    $region20: #{tpu_custom_call.1} parent=1 // pred_region
      _
    $region21: #{tpu_custom_call.1} parent=1 // pred_fallthru
      _
    // Predicated region
    $region22: #{tpu_custom_call.1} parent=1 // pred_check
      _
    $region23: #{tpu_custom_call.1} parent=1 // pred_check_branch
      %60 = sbr.rel (0) target = $region25
    $region24: #{tpu_custom_call.1} parent=1 // pred_region
      %s62 = ssub.s32 1024, 1024
      %63 = vsyncadd [#allocation9], %s62
      %s64 = sshll.u32 [#allocation8], 4
      %s65 = int_to_ptr.vmem [resolvable:$true] %s64
      %70 = dma.hbm_to_vmem [thread:$0]  %s5, 1024, %s65, [#allocation9], 64, 64, 4
    $region25: #{tpu_custom_call.1} parent=1 // pred_fallthru
      _
    // Predicated region
    $region26: #{tpu_custom_call.1} parent=1 // pred_check
      _
    $region27: #{tpu_custom_call.1} parent=1 // pred_check_branch
      %72 = sbr.rel (0) target = $region29
    $region28: #{tpu_custom_call.1} parent=1 // pred_region
      _
    $region29: #{tpu_custom_call.1} parent=1 // pred_fallthru
      _
    // Predicated region
    $region30: #{tpu_custom_call.1} parent=1 // pred_check
      _
    $region31: #{tpu_custom_call.1} parent=1 // pred_check_branch
      %74 = sbr.rel (0) target = $region33
    $region32: #{tpu_custom_call.1} parent=1 // pred_region
      %75 = dma.done [#allocation3], 256
    $region33: #{tpu_custom_call.1} parent=1 // pred_fallthru
      _
    // Predicated region
    $region34: #{tpu_custom_call.1} parent=1 // pred_check
      _
    $region35: #{tpu_custom_call.1} parent=1 // pred_check_branch
      %77 = sbr.rel (0) target = $region37
    $region36: #{tpu_custom_call.1} parent=1 // pred_region
      %78 = dma.done [#allocation6], 1024
    $region37: #{tpu_custom_call.1} parent=1 // pred_fallthru
      _
    // Predicated region
    $region38: #{tpu_custom_call.1} parent=1 // pred_check
      _
    $region39: #{tpu_custom_call.1} parent=1 // pred_check_branch
      %80 = sbr.rel (0) target = $region41
    $region40: #{tpu_custom_call.1} parent=1 // pred_region
      %81 = dma.done [#allocation6], 1024
    $region41: #{tpu_custom_call.1} parent=1 // pred_fallthru
      _
    // Predicated region
    $region42: #{tpu_custom_call.1} parent=1 // pred_check
      _
    $region43: #{tpu_custom_call.1} parent=1 // pred_check_branch
      %83 = sbr.rel (0) target = $region45
    $region44: #{tpu_custom_call.1} parent=1 // pred_region
      %84 = dma.done [#allocation9], 1024
    $region45: #{tpu_custom_call.1} parent=1 // pred_fallthru
      _
    %v86 = vld [vmem:[#allocation2] sm:$0xff]
    %v87 = vld [vmem:[#allocation2 + $0x8] sm:$0xff]
    %v88 = vpack.c.bf16 %v87, %v86
    %v89 = vld [vmem:[#allocation5] sm:$0xf]
    %v90 = vld [vmem:[#allocation5 + $0x4] sm:$0xf]
    %v91 = vld [vmem:[#allocation5 + $0x8] sm:$0xf]
    %v92 = vld [vmem:[#allocation5 + $0xc] sm:$0xf]
    %v93 = vld [vmem:[#allocation5 + $0x10] sm:$0xf]
    %v94 = vld [vmem:[#allocation5 + $0x14] sm:$0xf]
    %v95 = vld [vmem:[#allocation5 + $0x18] sm:$0xf]
    %v96 = vld [vmem:[#allocation5 + $0x1c] sm:$0xf]
    %v97 = vld [vmem:[#allocation5 + $0x20] sm:$0xf]
    %v98 = vld [vmem:[#allocation5 + $0x24] sm:$0xf]
    %v99 = vld [vmem:[#allocation5 + $0x28] sm:$0xf]
    %v100 = vld [vmem:[#allocation5 + $0x2c] sm:$0xf]
    %v101 = vld [vmem:[#allocation5 + $0x30] sm:$0xf]
    %v102 = vld [vmem:[#allocation5 + $0x34] sm:$0xf]
    %v103 = vld [vmem:[#allocation5 + $0x38] sm:$0xf]
    %v104 = vld [vmem:[#allocation5 + $0x3c] sm:$0xf]
    %v105 = vld [vmem:[%s2] sm:$0x1]
    %v107 = vlaneseq
    %v108 = vshrl.u32 %v107, 7
    %v109 = vsub.s32 0, %v108
    %v110 = vrot.slane %v105, %v109
    %v128 = vunpack.c.l.b16 %v89
    %v129 = vunpack.c.l.b16 %v90
    %v130 = vunpack.c.l.b16 %v91
    %v131 = vunpack.c.l.b16 %v92
    %v132 = vunpack.c.l.b16 %v93
    %v133 = vunpack.c.l.b16 %v94
    %v134 = vunpack.c.l.b16 %v95
    %v135 = vunpack.c.l.b16 %v96
    %v136 = vunpack.c.l.b16 %v97
    %v137 = vunpack.c.l.b16 %v98
    %v138 = vunpack.c.l.b16 %v99
    %v139 = vunpack.c.l.b16 %v100
    %v140 = vunpack.c.l.b16 %v101
    %v141 = vunpack.c.l.b16 %v102
    %v142 = vunpack.c.l.b16 %v103
    %v143 = vunpack.c.l.b16 %v104
    %v144 = vpack.c.b16 %v129, %v128
    %v145 = vpack.c.b16 %v131, %v130
    %v146 = vpack.c.b16 %v133, %v132
    %v147 = vpack.c.b16 %v135, %v134
    %v148 = vpack.c.b16 %v137, %v136
    %v149 = vpack.c.b16 %v139, %v138
    %v150 = vpack.c.b16 %v141, %v140
    %v151 = vpack.c.b16 %v143, %v142
    %160 = vmatprep.subr.bf16.mxu0 0
    %161 = vmatpush1.bf16.msra.mxu0 %v144
    %162 = vmatprep.subr.bf16.mxu0 0
    %163 = vmatpush1.bf16.msra.mxu0 %v145
    %164 = vmatprep.subr.bf16.mxu0 0
    %165 = vmatpush1.bf16.msra.mxu0 %v146
    %166 = vmatprep.subr.bf16.mxu0 0
    %167 = vmatpush1.bf16.msra.mxu0 %v147
    %168 = vmatprep.subr.bf16.mxu0 0
    %169 = vmatpush1.bf16.msra.mxu0 %v148
    %170 = vmatprep.subr.bf16.mxu0 0
    %171 = vmatpush1.bf16.msra.mxu0 %v149
    %172 = vmatprep.subr.bf16.mxu0 0
    %173 = vmatpush1.bf16.msra.mxu0 %v150
    %174 = vmatprep.subr.bf16.mxu0 0
    %175 = vmatpush1.bf16.msra.mxu0 %v151
    %176 = vmatprep.subr.bf16.mxu0 0
    %177 = vmatpush1.bf16.msra.mxu0 0
    %178 = vmatprep.subr.bf16.mxu0 0
    %179 = vmatpush1.bf16.msra.mxu0 0
    %180 = vmatprep.subr.bf16.mxu0 0
    %181 = vmatpush1.bf16.msra.mxu0 0
    %182 = vmatprep.subr.bf16.mxu0 0
    %183 = vmatpush1.bf16.msra.mxu0 0
    %184 = vmatprep.subr.bf16.mxu0 0
    %185 = vmatpush1.bf16.msra.mxu0 0
    %186 = vmatprep.subr.bf16.mxu0 0
    %187 = vmatpush1.bf16.msra.mxu0 0
    %188 = vmatprep.subr.bf16.mxu0 0
    %189 = vmatpush1.bf16.msra.mxu0 0
    %190 = vmatprep.subr.bf16.mxu0 0
    %191 = vmatpush1.bf16.msra.mxu0 0
    %192 = vmatprep.mubr.bf16.mxu0 0
    %193 = vmatmul.mubr.bf16.gmra.mrb[0].mxu0 %v88
    %v194 = vpop.f32.mrb[0].mxu0
    %v195 = vadd.f32 %v110, %v194
    %v196 = vpop.f32.mrb[0].mxu0
    %v197 = vpop.f32.mrb[0].mxu0
    %v198 = vadd.f32 %v110, %v197
    %v199 = vpop.f32.mrb[0].mxu0
    %200 = vdwg.mxu0
    %v201 = vmax.f32 %v195, 0.0
    %v202 = vmax.f32 %v198, 0.0
    %v203 = vpack.c.bf16 %v202, %v201
    %v204 = vld [vmem:[#allocation7] sm:$0xf]
    %v205 = vld [vmem:[#allocation7 + $0x4] sm:$0xf]
    %v206 = vld [vmem:[#allocation7 + $0x8] sm:$0xf]
    %v207 = vld [vmem:[#allocation7 + $0xc] sm:$0xf]
    %v208 = vld [vmem:[#allocation7 + $0x10] sm:$0xf]
    %v209 = vld [vmem:[#allocation7 + $0x14] sm:$0xf]
    %v210 = vld [vmem:[#allocation7 + $0x18] sm:$0xf]
    %v211 = vld [vmem:[#allocation7 + $0x1c] sm:$0xf]
    %v212 = vld [vmem:[#allocation7 + $0x20] sm:$0xf]
    %v213 = vld [vmem:[#allocation7 + $0x24] sm:$0xf]
    %v214 = vld [vmem:[#allocation7 + $0x28] sm:$0xf]
    %v215 = vld [vmem:[#allocation7 + $0x2c] sm:$0xf]
    %v216 = vld [vmem:[#allocation7 + $0x30] sm:$0xf]
    %v217 = vld [vmem:[#allocation7 + $0x34] sm:$0xf]
    %v218 = vld [vmem:[#allocation7 + $0x38] sm:$0xf]
    %v219 = vld [vmem:[#allocation7 + $0x3c] sm:$0xf]
    %v220 = vld [vmem:[%s4] sm:$0x1]
    %v222 = vlaneseq
    %v223 = vshrl.u32 %v222, 7
    %v224 = vsub.s32 0, %v223
    %v225 = vrot.slane %v220, %v224
    %v243 = vunpack.c.l.b16 %v204
    %v244 = vunpack.c.l.b16 %v205
    %v245 = vunpack.c.l.b16 %v206
    %v246 = vunpack.c.l.b16 %v207
    %v247 = vunpack.c.l.b16 %v208
    %v248 = vunpack.c.l.b16 %v209
    %v249 = vunpack.c.l.b16 %v210
    %v250 = vunpack.c.l.b16 %v211
    %v251 = vunpack.c.l.b16 %v212
    %v252 = vunpack.c.l.b16 %v213
    %v253 = vunpack.c.l.b16 %v214
    %v254 = vunpack.c.l.b16 %v215
    %v255 = vunpack.c.l.b16 %v216
    %v256 = vunpack.c.l.b16 %v217
    %v257 = vunpack.c.l.b16 %v218
    %v258 = vunpack.c.l.b16 %v219
    %v259 = vpack.c.b16 %v244, %v243
    %v260 = vpack.c.b16 %v246, %v245
    %v261 = vpack.c.b16 %v248, %v247
    %v262 = vpack.c.b16 %v250, %v249
    %v263 = vpack.c.b16 %v252, %v251
    %v264 = vpack.c.b16 %v254, %v253
    %v265 = vpack.c.b16 %v256, %v255
    %v266 = vpack.c.b16 %v258, %v257
    %275 = vmatprep.subr.bf16.mxu0 0
    %276 = vmatpush1.bf16.msra.mxu0 %v259
    %277 = vmatprep.subr.bf16.mxu0 0
    %278 = vmatpush1.bf16.msra.mxu0 %v260
    %279 = vmatprep.subr.bf16.mxu0 0
    %280 = vmatpush1.bf16.msra.mxu0 %v261
    %281 = vmatprep.subr.bf16.mxu0 0
    %282 = vmatpush1.bf16.msra.mxu0 %v262
    %283 = vmatprep.subr.bf16.mxu0 0
    %284 = vmatpush1.bf16.msra.mxu0 %v263
    %285 = vmatprep.subr.bf16.mxu0 0
    %286 = vmatpush1.bf16.msra.mxu0 %v264
    %287 = vmatprep.subr.bf16.mxu0 0
    %288 = vmatpush1.bf16.msra.mxu0 %v265
    %289 = vmatprep.subr.bf16.mxu0 0
    %290 = vmatpush1.bf16.msra.mxu0 %v266
    %291 = vmatprep.subr.bf16.mxu0 0
    %292 = vmatpush1.bf16.msra.mxu0 0
    %293 = vmatprep.subr.bf16.mxu0 0
    %294 = vmatpush1.bf16.msra.mxu0 0
    %295 = vmatprep.subr.bf16.mxu0 0
    %296 = vmatpush1.bf16.msra.mxu0 0
    %297 = vmatprep.subr.bf16.mxu0 0
    %298 = vmatpush1.bf16.msra.mxu0 0
    %299 = vmatprep.subr.bf16.mxu0 0
    %300 = vmatpush1.bf16.msra.mxu0 0
    %301 = vmatprep.subr.bf16.mxu0 0
    %302 = vmatpush1.bf16.msra.mxu0 0
    %303 = vmatprep.subr.bf16.mxu0 0
    %304 = vmatpush1.bf16.msra.mxu0 0
    %305 = vmatprep.subr.bf16.mxu0 0
    %306 = vmatpush1.bf16.msra.mxu0 0
    %307 = vmatprep.mubr.bf16.mxu0 0
    %308 = vmatmul.mubr.bf16.gmra.mrb[0].mxu0 %v203
    %v309 = vpop.f32.mrb[0].mxu0
    %v310 = vadd.f32 %v225, %v309
    %v311 = vpop.f32.mrb[0].mxu0
    %v312 = vpop.f32.mrb[0].mxu0
    %v313 = vadd.f32 %v225, %v312
    %v314 = vpop.f32.mrb[0].mxu0
    %315 = vdwg.mxu0
    %v316 = vmax.f32 %v310, 0.0
    %v317 = vmax.f32 %v313, 0.0
    %318 = vst [vmem:[#allocation10] sm:$0xff] %v316
    %319 = vst [vmem:[#allocation10 + $0x8] sm:$0xff] %v317
    %v320 = vpack.c.bf16 %v317, %v316
    %v321 = vld [vmem:[#allocation8] sm:$0xf]
    %v322 = vld [vmem:[#allocation8 + $0x4] sm:$0xf]
    %v323 = vld [vmem:[#allocation8 + $0x8] sm:$0xf]
    %v324 = vld [vmem:[#allocation8 + $0xc] sm:$0xf]
    %v325 = vld [vmem:[#allocation8 + $0x10] sm:$0xf]
    %v326 = vld [vmem:[#allocation8 + $0x14] sm:$0xf]
    %v327 = vld [vmem:[#allocation8 + $0x18] sm:$0xf]
    %v328 = vld [vmem:[#allocation8 + $0x1c] sm:$0xf]
    %v329 = vld [vmem:[#allocation8 + $0x20] sm:$0xf]
    %v330 = vld [vmem:[#allocation8 + $0x24] sm:$0xf]
    %v331 = vld [vmem:[#allocation8 + $0x28] sm:$0xf]
    %v332 = vld [vmem:[#allocation8 + $0x2c] sm:$0xf]
    %v333 = vld [vmem:[#allocation8 + $0x30] sm:$0xf]
    %v334 = vld [vmem:[#allocation8 + $0x34] sm:$0xf]
    %v335 = vld [vmem:[#allocation8 + $0x38] sm:$0xf]
    %v336 = vld [vmem:[#allocation8 + $0x3c] sm:$0xf]
    %v337 = vld [vmem:[%s6] sm:$0x1]
    %v339 = vlaneseq
    %v340 = vshrl.u32 %v339, 7
    %v341 = vsub.s32 0, %v340
    %v342 = vrot.slane %v337, %v341
    %v360 = vunpack.c.l.b16 %v321
    %v361 = vunpack.c.l.b16 %v322
    %v362 = vunpack.c.l.b16 %v323
    %v363 = vunpack.c.l.b16 %v324
    %v364 = vunpack.c.l.b16 %v325
    %v365 = vunpack.c.l.b16 %v326
    %v366 = vunpack.c.l.b16 %v327
    %v367 = vunpack.c.l.b16 %v328
    %v368 = vunpack.c.l.b16 %v329
    %v369 = vunpack.c.l.b16 %v330
    %v370 = vunpack.c.l.b16 %v331
    %v371 = vunpack.c.l.b16 %v332
    %v372 = vunpack.c.l.b16 %v333
    %v373 = vunpack.c.l.b16 %v334
    %v374 = vunpack.c.l.b16 %v335
    %v375 = vunpack.c.l.b16 %v336
    %v376 = vpack.c.b16 %v361, %v360
    %v377 = vpack.c.b16 %v363, %v362
    %v378 = vpack.c.b16 %v365, %v364
    %v379 = vpack.c.b16 %v367, %v366
    %v380 = vpack.c.b16 %v369, %v368
    %v381 = vpack.c.b16 %v371, %v370
    %v382 = vpack.c.b16 %v373, %v372
    %v383 = vpack.c.b16 %v375, %v374
    %392 = vmatprep.subr.bf16.mxu0 0
    %393 = vmatpush1.bf16.msra.mxu0 %v376
    %394 = vmatprep.subr.bf16.mxu0 0
    %395 = vmatpush1.bf16.msra.mxu0 %v377
    %396 = vmatprep.subr.bf16.mxu0 0
    %397 = vmatpush1.bf16.msra.mxu0 %v378
    %398 = vmatprep.subr.bf16.mxu0 0
    %399 = vmatpush1.bf16.msra.mxu0 %v379
    %400 = vmatprep.subr.bf16.mxu0 0
    %401 = vmatpush1.bf16.msra.mxu0 %v380
    %402 = vmatprep.subr.bf16.mxu0 0
    %403 = vmatpush1.bf16.msra.mxu0 %v381
    %404 = vmatprep.subr.bf16.mxu0 0
    %405 = vmatpush1.bf16.msra.mxu0 %v382
    %406 = vmatprep.subr.bf16.mxu0 0
    %407 = vmatpush1.bf16.msra.mxu0 %v383
    %408 = vmatprep.subr.bf16.mxu0 0
    %409 = vmatpush1.bf16.msra.mxu0 0
    %410 = vmatprep.subr.bf16.mxu0 0
    %411 = vmatpush1.bf16.msra.mxu0 0
    %412 = vmatprep.subr.bf16.mxu0 0
    %413 = vmatpush1.bf16.msra.mxu0 0
    %414 = vmatprep.subr.bf16.mxu0 0
    %415 = vmatpush1.bf16.msra.mxu0 0
    %416 = vmatprep.subr.bf16.mxu0 0
    %417 = vmatpush1.bf16.msra.mxu0 0
    %418 = vmatprep.subr.bf16.mxu0 0
    %419 = vmatpush1.bf16.msra.mxu0 0
    %420 = vmatprep.subr.bf16.mxu0 0
    %421 = vmatpush1.bf16.msra.mxu0 0
    %422 = vmatprep.subr.bf16.mxu0 0
    %423 = vmatpush1.bf16.msra.mxu0 0
    %424 = vmatprep.mubr.bf16.mxu0 0
    %425 = vmatmul.mubr.bf16.gmra.mrb[0].mxu0 %v320
    %v426 = vpop.f32.mrb[0].mxu0
    %v427 = vadd.f32 %v342, %v426
    %v428 = vpop.f32.mrb[0].mxu0
    %v429 = vpop.f32.mrb[0].mxu0
    %v430 = vadd.f32 %v342, %v429
    %v431 = vpop.f32.mrb[0].mxu0
    %432 = vdwg.mxu0
    %433 = vst [vmem:[#allocation11] sm:$0xff] %v427
    %434 = vst [vmem:[#allocation11 + $0x8] sm:$0xff] %v430
    // Predicated region
    $region46: #{tpu_custom_call.1} parent=1 // pred_check
      _
    $region47: #{tpu_custom_call.1} parent=1 // pred_check_branch
      %436 = sbr.rel (0) target = $region49
    $region48: #{tpu_custom_call.1} parent=1 // pred_region
      %s438 = ssub.s32 256, 256
      %439 = vsyncadd [#allocation4], %s438
      %s440 = sshll.u32 [#allocation10], 4
      %s441 = int_to_ptr.vmem [resolvable:$true] %s440
      %446 = dma.vmem_to_hbm [thread:$0]  %s441, 256, %s7, [#allocation4], 128, 128, 8
    $region49: #{tpu_custom_call.1} parent=1 // pred_fallthru
      _
    // Predicated region
    $region50: #{tpu_custom_call.1} parent=1 // pred_check
      _
    $region51: #{tpu_custom_call.1} parent=1 // pred_check_branch
      %448 = sbr.rel (0) target = $region53
    $region52: #{tpu_custom_call.1} parent=1 // pred_region
      %s450 = ssub.s32 256, 256
      %451 = vsyncadd [#allocation12], %s450
      %s452 = sshll.u32 [#allocation11], 4
      %s453 = int_to_ptr.vmem [resolvable:$true] %s452
      %458 = dma.vmem_to_hbm [thread:$0]  %s453, 256, %s8, [#allocation12], 128, 128, 8
    $region53: #{tpu_custom_call.1} parent=1 // pred_fallthru
      _
    // Predicated region
    $region54: #{tpu_custom_call.1} parent=1 // pred_check
      _
    $region55: #{tpu_custom_call.1} parent=1 // pred_check_branch
      %460 = sbr.rel (0) target = $region57
    $region56: #{tpu_custom_call.1} parent=1 // pred_region
      %461 = dma.done [#allocation4], 256
    $region57: #{tpu_custom_call.1} parent=1 // pred_fallthru
      _
    // Predicated region
    $region58: #{tpu_custom_call.1} parent=1 // pred_check
      _
    $region59: #{tpu_custom_call.1} parent=1 // pred_check_branch
      %463 = sbr.rel (0) target = $region61
    $region60: #{tpu_custom_call.1} parent=1 // pred_region
      %464 = dma.done [#allocation12], 256
    $region61: #{tpu_custom_call.1} parent=1 // pred_fallthru
      _
    %465 = vsyncpa [#allocation3], 1
    %466 = vsyncpa [#allocation6], 1
    %467 = vsyncpa [#allocation9], 1
    %468 = vsyncpa [#allocation4], 1
    %469 = vsyncpa [#allocation12], 1

// kernel: tpu_custom_call.1
$region0: #{tpu_custom_call.1}
  #allocation0 [shape = 'u32[]', space=smem, size = 0x4, offset = 0x4, fixed_abs, tag = 'smem constant byte address 0x4 - core index']
  #allocation1 [shape = 'u32[144,128]{1,0:T(1,128)}', space=vmem, size = 0x12000, scoped, tag = 'internal scratch']
  %s0 = inlined_call_operand.hbm [shape: f32[16,128], index: 0, kind: input, shape index: {}]
  %s1 = inlined_call_operand.hbm [shape: bf16[128,128], index: 1, kind: input, shape index: {}]
  %s2 = inlined_call_operand.vmem [shape: f32[1,128], index: 2, kind: input, shape index: {}]
  %s3 = inlined_call_operand.hbm [shape: bf16[128,128], index: 3, kind: input, shape index: {}]
  %s4 = inlined_call_operand.vmem [shape: f32[1,128], index: 4, kind: input, shape index: {}]
  %s5 = inlined_call_operand.hbm [shape: bf16[128,128], index: 5, kind: input, shape index: {}]
  %s6 = inlined_call_operand.vmem [shape: f32[1,128], index: 6, kind: input, shape index: {}]
  %s7 = inlined_call_operand.hbm [shape: f32[16,128], index: 7, kind: output, shape index: {0}]
  %s8 = inlined_call_operand.hbm [shape: f32[16,128], index: 8, kind: output, shape index: {1}]
  %9 = xla_tuple %s7, %s8
  %s10 = sld [smem:[#allocation0]]
  $region62: #{tpu_custom_call.1} parent=0
    _
  %s12 = ssub.s32 1, %s10
  %s13 = scalar_select 0, %s12, %s10
  $region1: #{tpu_custom_call.1} parent=0
    #allocation2 [shape = 'u8[8192]{0}', space=vmem, size = 0x2000, scoped, tag = 'input window, operand 0, single buffered']
    #allocation3 [shape = 's32[1]{0}', space=sflag, size = 0x4, scoped, tag = 'scoped memory for tpu_custom_call.1']
    #allocation4 [shape = 's32[1]{0}', space=sflag, size = 0x4, scoped, tag = 'scoped memory for tpu_custom_call.1']
    #allocation5 [shape = 'u8[32768]{0}', space=vmem, size = 0x8000, scoped, tag = 'input window, operand 1, single buffered']
    #allocation6 [shape = 's32[1]{0}', space=sflag, size = 0x4, scoped, tag = 'scoped memory for tpu_custom_call.1']
    #allocation7 [shape = 'u8[32768]{0}', space=vmem, size = 0x8000, scoped, tag = 'input window, operand 3, single buffered']
    #allocation8 [shape = 'u8[32768]{0}', space=vmem, size = 0x8000, scoped, tag = 'input window, operand 5, single buffered']
    #allocation9 [shape = 's32[1]{0}', space=sflag, size = 0x4, scoped, tag = 'scoped memory for tpu_custom_call.1']
    #allocation10 [shape = 'u8[8192]{0}', space=vmem, size = 0x2000, scoped, tag = 'output window, operand 0, single buffered']
    #allocation11 [shape = 'u8[8192]{0}', space=vmem, size = 0x2000, scoped, tag = 'output window, operand 1, single buffered']
    #allocation12 [shape = 's32[1]{0}', space=sflag, size = 0x4, scoped, tag = 'scoped memory for tpu_custom_call.1']
    %14 = vsyncpa [#allocation3], 0
    %15 = vsyncpa [#allocation6], 0
    %16 = vsyncpa [#allocation9], 0
    %17 = vsyncpa [#allocation4], 0
    %18 = vsyncpa [#allocation12], 0
    // Predicated region
    $region2: #{tpu_custom_call.1} parent=1 // pred_check
      _
    $region3: #{tpu_custom_call.1} parent=1 // pred_check_branch
      %20 = sbr.rel (0) target = $region5
    $region4: #{tpu_custom_call.1} parent=1 // pred_region
      %s22 = ssub.s32 256, 256
      %23 = vsyncadd [#allocation3], %s22
      %s24 = sshll.u32 [#allocation2], 4
      %s25 = int_to_ptr.vmem [resolvable:$true] %s24
      %30 = dma.hbm_to_vmem [thread:$0]  %s0, 256, %s25, [#allocation3], 128, 128, 8
    $region5: #{tpu_custom_call.1} parent=1 // pred_fallthru
      _
    // Predicated region
    $region6: #{tpu_custom_call.1} parent=1 // pred_check
      _
    $region7: #{tpu_custom_call.1} parent=1 // pred_check_branch
      %32 = sbr.rel (0) target = $region9
    $region8: #{tpu_custom_call.1} parent=1 // pred_region
      %s34 = ssub.s32 1024, 1024
      %35 = vsyncadd [#allocation6], %s34
      %s36 = sshll.u32 [#allocation5], 4
      %s37 = int_to_ptr.vmem [resolvable:$true] %s36
      %42 = dma.hbm_to_vmem [thread:$0]  %s1, 1024, %s37, [#allocation6], 64, 64, 4
    $region9: #{tpu_custom_call.1} parent=1 // pred_fallthru
      _
    // Predicated region
    $region10: #{tpu_custom_call.1} parent=1 // pred_check
      _
    $region11: #{tpu_custom_call.1} parent=1 // pred_check_branch
      %44 = sbr.rel (0) target = $region13
    $region12: #{tpu_custom_call.1} parent=1 // pred_region
      _
    $region13: #{tpu_custom_call.1} parent=1 // pred_fallthru
      _
    // Predicated region
    $region14: #{tpu_custom_call.1} parent=1 // pred_check
      _
    $region15: #{tpu_custom_call.1} parent=1 // pred_check_branch
      %46 = sbr.rel (0) target = $region17
    $region16: #{tpu_custom_call.1} parent=1 // pred_region
      %s48 = ssub.s32 1024, 1024
      %49 = vsyncadd [#allocation6], %s48
      %s50 = sshll.u32 [#allocation7], 4
      %s51 = int_to_ptr.vmem [resolvable:$true] %s50
      %56 = dma.hbm_to_vmem [thread:$0]  %s3, 1024, %s51, [#allocation6], 64, 64, 4
    $region17: #{tpu_custom_call.1} parent=1 // pred_fallthru
      _
    // Predicated region
    $region18: #{tpu_custom_call.1} parent=1 // pred_check
      _
    $region19: #{tpu_custom_call.1} parent=1 // pred_check_branch
      %58 = sbr.rel (0) target = $region21
    $region20: #{tpu_custom_call.1} parent=1 // pred_region
      _
    $region21: #{tpu_custom_call.1} parent=1 // pred_fallthru
      _
    // Predicated region
    $region22: #{tpu_custom_call.1} parent=1 // pred_check
      _
    $region23: #{tpu_custom_call.1} parent=1 // pred_check_branch
      %60 = sbr.rel (0) target = $region25
    $region24: #{tpu_custom_call.1} parent=1 // pred_region
      %s62 = ssub.s32 1024, 1024
      %63 = vsyncadd [#allocation9], %s62
      %s64 = sshll.u32 [#allocation8], 4
      %s65 = int_to_ptr.vmem [resolvable:$true] %s64
      %70 = dma.hbm_to_vmem [thread:$0]  %s5, 1024, %s65, [#allocation9], 64, 64, 4
    $region25: #{tpu_custom_call.1} parent=1 // pred_fallthru
      _
    // Predicated region
    $region26: #{tpu_custom_call.1} parent=1 // pred_check
      _
    $region27: #{tpu_custom_call.1} parent=1 // pred_check_branch
      %72 = sbr.rel (0) target = $region29
    $region28: #{tpu_custom_call.1} parent=1 // pred_region
      _
    $region29: #{tpu_custom_call.1} parent=1 // pred_fallthru
      _
    // Predicated region
    $region30: #{tpu_custom_call.1} parent=1 // pred_check
      _
    $region31: #{tpu_custom_call.1} parent=1 // pred_check_branch
      %74 = sbr.rel (0) target = $region33
    $region32: #{tpu_custom_call.1} parent=1 // pred_region
      %75 = dma.done [#allocation3], 256
    $region33: #{tpu_custom_call.1} parent=1 // pred_fallthru
      _
    // Predicated region
    $region34: #{tpu_custom_call.1} parent=1 // pred_check
      _
    $region35: #{tpu_custom_call.1} parent=1 // pred_check_branch
      %77 = sbr.rel (0) target = $region37
    $region36: #{tpu_custom_call.1} parent=1 // pred_region
      %78 = dma.done [#allocation6], 1024
    $region37: #{tpu_custom_call.1} parent=1 // pred_fallthru
      _
    // Predicated region
    $region38: #{tpu_custom_call.1} parent=1 // pred_check
      _
    $region39: #{tpu_custom_call.1} parent=1 // pred_check_branch
      %80 = sbr.rel (0) target = $region41
    $region40: #{tpu_custom_call.1} parent=1 // pred_region
      %81 = dma.done [#allocation6], 1024
    $region41: #{tpu_custom_call.1} parent=1 // pred_fallthru
      _
    // Predicated region
    $region42: #{tpu_custom_call.1} parent=1 // pred_check
      _
    $region43: #{tpu_custom_call.1} parent=1 // pred_check_branch
      %83 = sbr.rel (0) target = $region45
    $region44: #{tpu_custom_call.1} parent=1 // pred_region
      %84 = dma.done [#allocation9], 1024
    $region45: #{tpu_custom_call.1} parent=1 // pred_fallthru
      _
    %v86 = vld [vmem:[#allocation2] sm:$0xff]
    %v87 = vld [vmem:[#allocation2 + $0x8] sm:$0xff]
    %v88 = vpack.c.bf16 %v87, %v86
    %v89 = vld [vmem:[#allocation5] sm:$0xf]
    %v90 = vld [vmem:[#allocation5 + $0x4] sm:$0xf]
    %v91 = vld [vmem:[#allocation5 + $0x8] sm:$0xf]
    %v92 = vld [vmem:[#allocation5 + $0xc] sm:$0xf]
    %v93 = vld [vmem:[#allocation5 + $0x10] sm:$0xf]
    %v94 = vld [vmem:[#allocation5 + $0x14] sm:$0xf]
    %v95 = vld [vmem:[#allocation5 + $0x18] sm:$0xf]
    %v96 = vld [vmem:[#allocation5 + $0x1c] sm:$0xf]
    %v97 = vld [vmem:[#allocation5 + $0x20] sm:$0xf]
    %v98 = vld [vmem:[#allocation5 + $0x24] sm:$0xf]
    %v99 = vld [vmem:[#allocation5 + $0x28] sm:$0xf]
    %v100 = vld [vmem:[#allocation5 + $0x2c] sm:$0xf]
    %v101 = vld [vmem:[#allocation5 + $0x30] sm:$0xf]
    %v102 = vld [vmem:[#allocation5 + $0x34] sm:$0xf]
    %v103 = vld [vmem:[#allocation5 + $0x38] sm:$0xf]
    %v104 = vld [vmem:[#allocation5 + $0x3c] sm:$0xf]
    %v105 = vld [vmem:[%s2] sm:$0x1]
    %v107 = vlaneseq
    %v108 = vshrl.u32 %v107, 7
    %v109 = vsub.s32 0, %v108
    %v110 = vrot.slane %v105, %v109
    %v128 = vunpack.c.l.b16 %v89
    %v129 = vunpack.c.l.b16 %v90
    %v130 = vunpack.c.l.b16 %v91
    %v131 = vunpack.c.l.b16 %v92
    %v132 = vunpack.c.l.b16 %v93
    %v133 = vunpack.c.l.b16 %v94
    %v134 = vunpack.c.l.b16 %v95
    %v135 = vunpack.c.l.b16 %v96
    %v136 = vunpack.c.l.b16 %v97
    %v137 = vunpack.c.l.b16 %v98
    %v138 = vunpack.c.l.b16 %v99
    %v139 = vunpack.c.l.b16 %v100
    %v140 = vunpack.c.l.b16 %v101
    %v141 = vunpack.c.l.b16 %v102
    %v142 = vunpack.c.l.b16 %v103
    %v143 = vunpack.c.l.b16 %v104
    %v144 = vpack.c.b16 %v129, %v128
    %v145 = vpack.c.b16 %v131, %v130
    %v146 = vpack.c.b16 %v133, %v132
    %v147 = vpack.c.b16 %v135, %v134
    %v148 = vpack.c.b16 %v137, %v136
    %v149 = vpack.c.b16 %v139, %v138
    %v150 = vpack.c.b16 %v141, %v140
    %v151 = vpack.c.b16 %v143, %v142
    %160 = vmatprep.subr.bf16.mxu0 0
    %161 = vmatpush1.bf16.msra.mxu0 %v144
    %162 = vmatprep.subr.bf16.mxu0 0
    %163 = vmatpush1.bf16.msra.mxu0 %v145
    %164 = vmatprep.subr.bf16.mxu0 0
    %165 = vmatpush1.bf16.msra.mxu0 %v146
    %166 = vmatprep.subr.bf16.mxu0 0
    %167 = vmatpush1.bf16.msra.mxu0 %v147
    %168 = vmatprep.subr.bf16.mxu0 0
    %169 = vmatpush1.bf16.msra.mxu0 %v148
    %170 = vmatprep.subr.bf16.mxu0 0
    %171 = vmatpush1.bf16.msra.mxu0 %v149
    %172 = vmatprep.subr.bf16.mxu0 0
    %173 = vmatpush1.bf16.msra.mxu0 %v150
    %174 = vmatprep.subr.bf16.mxu0 0
    %175 = vmatpush1.bf16.msra.mxu0 %v151
    %176 = vmatprep.subr.bf16.mxu0 0
    %177 = vmatpush1.bf16.msra.mxu0 0
    %178 = vmatprep.subr.bf16.mxu0 0
    %179 = vmatpush1.bf16.msra.mxu0 0
    %180 = vmatprep.subr.bf16.mxu0 0
    %181 = vmatpush1.bf16.msra.mxu0 0
    %182 = vmatprep.subr.bf16.mxu0 0
    %183 = vmatpush1.bf16.msra.mxu0 0
    %184 = vmatprep.subr.bf16.mxu0 0
    %185 = vmatpush1.bf16.msra.mxu0 0
    %186 = vmatprep.subr.bf16.mxu0 0
    %187 = vmatpush1.bf16.msra.mxu0 0
    %188 = vmatprep.subr.bf16.mxu0 0
    %189 = vmatpush1.bf16.msra.mxu0 0
    %190 = vmatprep.subr.bf16.mxu0 0
    %191 = vmatpush1.bf16.msra.mxu0 0
    %192 = vmatprep.mubr.bf16.mxu0 0
    %193 = vmatmul.mubr.bf16.gmra.mrb[0].mxu0 %v88
    %v194 = vpop.f32.mrb[0].mxu0
    %v195 = vadd.f32 %v110, %v194
    %v196 = vpop.f32.mrb[0].mxu0
    %v197 = vpop.f32.mrb[0].mxu0
    %v198 = vadd.f32 %v110, %v197
    %v199 = vpop.f32.mrb[0].mxu0
    %200 = vdwg.mxu0
    %v201 = vmax.f32 %v195, 0.0
    %v202 = vmax.f32 %v198, 0.0
    %v203 = vpack.c.bf16 %v202, %v201
    %v204 = vld [vmem:[#allocation7] sm:$0xf]
    %v205 = vld [vmem:[#allocation7 + $0x4] sm:$0xf]
    %v206 = vld [vmem:[#allocation7 + $0x8] sm:$0xf]
    %v207 = vld [vmem:[#allocation7 + $0xc] sm:$0xf]
    %v208 = vld [vmem:[#allocation7 + $0x10] sm:$0xf]
    %v209 = vld [vmem:[#allocation7 + $0x14] sm:$0xf]
    %v210 = vld [vmem:[#allocation7 + $0x18] sm:$0xf]
    %v211 = vld [vmem:[#allocation7 + $0x1c] sm:$0xf]
    %v212 = vld [vmem:[#allocation7 + $0x20] sm:$0xf]
    %v213 = vld [vmem:[#allocation7 + $0x24] sm:$0xf]
    %v214 = vld [vmem:[#allocation7 + $0x28] sm:$0xf]
    %v215 = vld [vmem:[#allocation7 + $0x2c] sm:$0xf]
    %v216 = vld [vmem:[#allocation7 + $0x30] sm:$0xf]
    %v217 = vld [vmem:[#allocation7 + $0x34] sm:$0xf]
    %v218 = vld [vmem:[#allocation7 + $0x38] sm:$0xf]
    %v219 = vld [vmem:[#allocation7 + $0x3c] sm:$0xf]
    %v220 = vld [vmem:[%s4] sm:$0x1]
    %v222 = vlaneseq
    %v223 = vshrl.u32 %v222, 7
    %v224 = vsub.s32 0, %v223
    %v225 = vrot.slane %v220, %v224
    %v243 = vunpack.c.l.b16 %v204
    %v244 = vunpack.c.l.b16 %v205
    %v245 = vunpack.c.l.b16 %v206
    %v246 = vunpack.c.l.b16 %v207
    %v247 = vunpack.c.l.b16 %v208
    %v248 = vunpack.c.l.b16 %v209
    %v249 = vunpack.c.l.b16 %v210
    %v250 = vunpack.c.l.b16 %v211
    %v251 = vunpack.c.l.b16 %v212
    %v252 = vunpack.c.l.b16 %v213
    %v253 = vunpack.c.l.b16 %v214
    %v254 = vunpack.c.l.b16 %v215
    %v255 = vunpack.c.l.b16 %v216
    %v256 = vunpack.c.l.b16 %v217
    %v257 = vunpack.c.l.b16 %v218
    %v258 = vunpack.c.l.b16 %v219
    %v259 = vpack.c.b16 %v244, %v243
    %v260 = vpack.c.b16 %v246, %v245
    %v261 = vpack.c.b16 %v248, %v247
    %v262 = vpack.c.b16 %v250, %v249
    %v263 = vpack.c.b16 %v252, %v251
    %v264 = vpack.c.b16 %v254, %v253
    %v265 = vpack.c.b16 %v256, %v255
    %v266 = vpack.c.b16 %v258, %v257
    %275 = vmatprep.subr.bf16.mxu0 0
    %276 = vmatpush1.bf16.msra.mxu0 %v259
    %277 = vmatprep.subr.bf16.mxu0 0
    %278 = vmatpush1.bf16.msra.mxu0 %v260
    %279 = vmatprep.subr.bf16.mxu0 0
    %280 = vmatpush1.bf16.msra.mxu0 %v261
    %281 = vmatprep.subr.bf16.mxu0 0
    %282 = vmatpush1.bf16.msra.mxu0 %v262
    %283 = vmatprep.subr.bf16.mxu0 0
    %284 = vmatpush1.bf16.msra.mxu0 %v263
    %285 = vmatprep.subr.bf16.mxu0 0
    %286 = vmatpush1.bf16.msra.mxu0 %v264
    %287 = vmatprep.subr.bf16.mxu0 0
    %288 = vmatpush1.bf16.msra.mxu0 %v265
    %289 = vmatprep.subr.bf16.mxu0 0
    %290 = vmatpush1.bf16.msra.mxu0 %v266
    %291 = vmatprep.subr.bf16.mxu0 0
    %292 = vmatpush1.bf16.msra.mxu0 0
    %293 = vmatprep.subr.bf16.mxu0 0
    %294 = vmatpush1.bf16.msra.mxu0 0
    %295 = vmatprep.subr.bf16.mxu0 0
    %296 = vmatpush1.bf16.msra.mxu0 0
    %297 = vmatprep.subr.bf16.mxu0 0
    %298 = vmatpush1.bf16.msra.mxu0 0
    %299 = vmatprep.subr.bf16.mxu0 0
    %300 = vmatpush1.bf16.msra.mxu0 0
    %301 = vmatprep.subr.bf16.mxu0 0
    %302 = vmatpush1.bf16.msra.mxu0 0
    %303 = vmatprep.subr.bf16.mxu0 0
    %304 = vmatpush1.bf16.msra.mxu0 0
    %305 = vmatprep.subr.bf16.mxu0 0
    %306 = vmatpush1.bf16.msra.mxu0 0
    %307 = vmatprep.mubr.bf16.mxu0 0
    %308 = vmatmul.mubr.bf16.gmra.mrb[0].mxu0 %v203
    %v309 = vpop.f32.mrb[0].mxu0
    %v310 = vadd.f32 %v225, %v309
    %v311 = vpop.f32.mrb[0].mxu0
    %v312 = vpop.f32.mrb[0].mxu0
    %v313 = vadd.f32 %v225, %v312
    %v314 = vpop.f32.mrb[0].mxu0
    %315 = vdwg.mxu0
    %v316 = vmax.f32 %v310, 0.0
    %v317 = vmax.f32 %v313, 0.0
    %318 = vst [vmem:[#allocation10] sm:$0xff] %v316
    %319 = vst [vmem:[#allocation10 + $0x8] sm:$0xff] %v317
    %v320 = vpack.c.bf16 %v317, %v316
    %v321 = vld [vmem:[#allocation8] sm:$0xf]
    %v322 = vld [vmem:[#allocation8 + $0x4] sm:$0xf]
    %v323 = vld [vmem:[#allocation8 + $0x8] sm:$0xf]
    %v324 = vld [vmem:[#allocation8 + $0xc] sm:$0xf]
    %v325 = vld [vmem:[#allocation8 + $0x10] sm:$0xf]
    %v326 = vld [vmem:[#allocation8 + $0x14] sm:$0xf]
    %v327 = vld [vmem:[#allocation8 + $0x18] sm:$0xf]
    %v328 = vld [vmem:[#allocation8 + $0x1c] sm:$0xf]
    %v329 = vld [vmem:[#allocation8 + $0x20] sm:$0xf]
    %v330 = vld [vmem:[#allocation8 + $0x24] sm:$0xf]
    %v331 = vld [vmem:[#allocation8 + $0x28] sm:$0xf]
    %v332 = vld [vmem:[#allocation8 + $0x2c] sm:$0xf]
    %v333 = vld [vmem:[#allocation8 + $0x30] sm:$0xf]
    %v334 = vld [vmem:[#allocation8 + $0x34] sm:$0xf]
    %v335 = vld [vmem:[#allocation8 + $0x38] sm:$0xf]
    %v336 = vld [vmem:[#allocation8 + $0x3c] sm:$0xf]
    %v337 = vld [vmem:[%s6] sm:$0x1]
    %v339 = vlaneseq
    %v340 = vshrl.u32 %v339, 7
    %v341 = vsub.s32 0, %v340
    %v342 = vrot.slane %v337, %v341
    %v360 = vunpack.c.l.b16 %v321
    %v361 = vunpack.c.l.b16 %v322
    %v362 = vunpack.c.l.b16 %v323
    %v363 = vunpack.c.l.b16 %v324
    %v364 = vunpack.c.l.b16 %v325
    %v365 = vunpack.c.l.b16 %v326
    %v366 = vunpack.c.l.b16 %v327
    %v367 = vunpack.c.l.b16 %v328
    %v368 = vunpack.c.l.b16 %v329
    %v369 = vunpack.c.l.b16 %v330
    %v370 = vunpack.c.l.b16 %v331
    %v371 = vunpack.c.l.b16 %v332
    %v372 = vunpack.c.l.b16 %v333
    %v373 = vunpack.c.l.b16 %v334
    %v374 = vunpack.c.l.b16 %v335
    %v375 = vunpack.c.l.b16 %v336
    %v376 = vpack.c.b16 %v361, %v360
    %v377 = vpack.c.b16 %v363, %v362
    %v378 = vpack.c.b16 %v365, %v364
    %v379 = vpack.c.b16 %v367, %v366
    %v380 = vpack.c.b16 %v369, %v368
    %v381 = vpack.c.b16 %v371, %v370
    %v382 = vpack.c.b16 %v373, %v372
    %v383 = vpack.c.b16 %v375, %v374
    %392 = vmatprep.subr.bf16.mxu0 0
    %393 = vmatpush1.bf16.msra.mxu0 %v376
    %394 = vmatprep.subr.bf16.mxu0 0
    %395 = vmatpush1.bf16.msra.mxu0 %v377
    %396 = vmatprep.subr.bf16.mxu0 0
    %397 = vmatpush1.bf16.msra.mxu0 %v378
    %398 = vmatprep.subr.bf16.mxu0 0
    %399 = vmatpush1.bf16.msra.mxu0 %v379
    %400 = vmatprep.subr.bf16.mxu0 0
    %401 = vmatpush1.bf16.msra.mxu0 %v380
    %402 = vmatprep.subr.bf16.mxu0 0
    %403 = vmatpush1.bf16.msra.mxu0 %v381
    %404 = vmatprep.subr.bf16.mxu0 0
    %405 = vmatpush1.bf16.msra.mxu0 %v382
    %406 = vmatprep.subr.bf16.mxu0 0
    %407 = vmatpush1.bf16.msra.mxu0 %v383
    %408 = vmatprep.subr.bf16.mxu0 0
    %409 = vmatpush1.bf16.msra.mxu0 0
    %410 = vmatprep.subr.bf16.mxu0 0
    %411 = vmatpush1.bf16.msra.mxu0 0
    %412 = vmatprep.subr.bf16.mxu0 0
    %413 = vmatpush1.bf16.msra.mxu0 0
    %414 = vmatprep.subr.bf16.mxu0 0
    %415 = vmatpush1.bf16.msra.mxu0 0
    %416 = vmatprep.subr.bf16.mxu0 0
    %417 = vmatpush1.bf16.msra.mxu0 0
    %418 = vmatprep.subr.bf16.mxu0 0
    %419 = vmatpush1.bf16.msra.mxu0 0
    %420 = vmatprep.subr.bf16.mxu0 0
    %421 = vmatpush1.bf16.msra.mxu0 0
    %422 = vmatprep.subr.bf16.mxu0 0
    %423 = vmatpush1.bf16.msra.mxu0 0
    %424 = vmatprep.mubr.bf16.mxu0 0
    %425 = vmatmul.mubr.bf16.gmra.mrb[0].mxu0 %v320
    %v426 = vpop.f32.mrb[0].mxu0
    %v427 = vadd.f32 %v342, %v426
    %v428 = vpop.f32.mrb[0].mxu0
    %v429 = vpop.f32.mrb[0].mxu0
    %v430 = vadd.f32 %v342, %v429
    %v431 = vpop.f32.mrb[0].mxu0
    %432 = vdwg.mxu0
    %433 = vst [vmem:[#allocation11] sm:$0xff] %v427
    %434 = vst [vmem:[#allocation11 + $0x8] sm:$0xff] %v430
    // Predicated region
    $region46: #{tpu_custom_call.1} parent=1 // pred_check
      _
    $region47: #{tpu_custom_call.1} parent=1 // pred_check_branch
      %436 = sbr.rel (0) target = $region49
    $region48: #{tpu_custom_call.1} parent=1 // pred_region
      %s438 = ssub.s32 256, 256
      %439 = vsyncadd [#allocation4], %s438
      %s440 = sshll.u32 [#allocation10], 4
      %s441 = int_to_ptr.vmem [resolvable:$true] %s440
      %446 = dma.vmem_to_hbm [thread:$0]  %s441, 256, %s7, [#allocation4], 128, 128, 8
    $region49: #{tpu_custom_call.1} parent=1 // pred_fallthru
      _
    // Predicated region
    $region50: #{tpu_custom_call.1} parent=1 // pred_check
      _
    $region51: #{tpu_custom_call.1} parent=1 // pred_check_branch
      %448 = sbr.rel (0) target = $region53
    $region52: #{tpu_custom_call.1} parent=1 // pred_region
      %s450 = ssub.s32 256, 256
      %451 = vsyncadd [#allocation12], %s450
      %s452 = sshll.u32 [#allocation11], 4
      %s453 = int_to_ptr.vmem [resolvable:$true] %s452
      %458 = dma.vmem_to_hbm [thread:$0]  %s453, 256, %s8, [#allocation12], 128, 128, 8
    $region53: #{tpu_custom_call.1} parent=1 // pred_fallthru
      _
    // Predicated region
    $region54: #{tpu_custom_call.1} parent=1 // pred_check
      _
    $region55: #{tpu_custom_call.1} parent=1 // pred_check_branch
      %460 = sbr.rel (0) target = $region57
    $region56: #{tpu_custom_call.1} parent=1 // pred_region
      %461 = dma.done [#allocation4], 256
    $region57: #{tpu_custom_call.1} parent=1 // pred_fallthru
      _
    // Predicated region
    $region58: #{tpu_custom_call.1} parent=1 // pred_check
      _
    $region59: #{tpu_custom_call.1} parent=1 // pred_check_branch
      %463 = sbr.rel (0) target = $region61
    $region60: #{tpu_custom_call.1} parent=1 // pred_region
      %464 = dma.done [#allocation12], 256
    $region61: #{tpu_custom_call.1} parent=1 // pred_fallthru
      _
    %465 = vsyncpa [#allocation3], 1
    %466 = vsyncpa [#allocation6], 1
    %467 = vsyncpa [#allocation9], 1
    %468 = vsyncpa [#allocation4], 1
    %469 = vsyncpa [#allocation12], 1

</llo_original>
